<compile_context>
chip_gen: v6e
topology: v6e:2x2x1
jax: 0.10.0
libtpu: 0.0.40
codegen_flags: <defaults>
</compile_context>

<pallas_src>
import functools

import jax
import jax.numpy as jnp
from jax.experimental import pallas as pl
from jax.experimental.pallas import tpu as pltpu

HIDDEN = 128  # fixed by the module definition


def _round_up(x, m):
    return ((x + m - 1) // m) * m


def _choose_block_b(B):
    """Batch tile: single tile for small B, 2 tiles for megacore at mid B, 2048 rows for large B."""
    if B <= 1024:
        return B                          # grid=(1,), no batch padding
    if B <= 4096:
        return _round_up(B, 16) // 2      # exactly 2 tiles -> both TCs on v7x
    return 2048


def _vmem_limit_bytes(vmem_bytes):
    """Raise the scoped-VMEM limit only when needed; cap by the chip's physical VMEM."""
    if vmem_bytes <= 32 * 1024 * 1024:
        return None
    try:
        cap = pltpu.get_tpu_info().vmem_capacity_bytes
    except Exception:  # pragma: no cover - conservative fallback
        cap = 64 * 1024 * 1024
    return min(int(vmem_bytes * 2), int(cap * 0.85))


def _mlp(y, w1, b1, w2, b2, w3, b3, compute_dtype):
    """3-layer MLP: MXU matmuls in compute_dtype with f32 accumulation; f32 bias+tanh."""
    h1 = jnp.dot(y.astype(compute_dtype), w1, preferred_element_type=jnp.float32) + b1
    h1 = jnp.tanh(h1)
    h2 = jnp.dot(h1.astype(compute_dtype), w2, preferred_element_type=jnp.float32) + b2
    h2 = jnp.tanh(h2)
    return jnp.dot(h2.astype(compute_dtype), w3, preferred_element_type=jnp.float32) + b3


def _odefunc_kernel(y_ref, w1_ref, b1_ref, w2_ref, b2_ref, w3_ref, b3_ref, o_ref):
    """Single RHS evaluation on one (block_b, D) batch tile; weights fully resident."""
    out = _mlp(y_ref[...], w1_ref[...], b1_ref[...], w2_ref[...], b2_ref[...],
               w3_ref[...], b3_ref[...], w1_ref.dtype)
    o_ref[...] = out.astype(o_ref.dtype)


def _odefunc_euler_kernel(y_ref, w1_ref, b1_ref, w2_ref, b2_ref, w3_ref, b3_ref, o_ref,
                          *, n_steps, dt):
    """Fused fixed-step Euler: y_{k+1} = y_k + dt * f(y_k), weights loaded to VMEM once."""
    compute_dtype = w1_ref.dtype
    w1, b1 = w1_ref[...], b1_ref[...]
    w2, b2 = w2_ref[...], b2_ref[...]
    w3, b3 = w3_ref[...], b3_ref[...]

    def body(_, y):
        return y + dt * _mlp(y, w1, b1, w2, b2, w3, b3, compute_dtype)

    y_final = jax.lax.fori_loop(0, n_steps, body, y_ref[...].astype(jnp.float32))
    o_ref[...] = y_final.astype(o_ref.dtype)


def _mlp_specs(block_b, D):
    in_specs = [
        pl.BlockSpec((block_b, D), lambda i: (i, 0)),      # y tile
        pl.BlockSpec((D, HIDDEN), lambda i: (0, 0)),       # w1 (in, out)
        pl.BlockSpec((1, HIDDEN), lambda i: (0, 0)),       # b1
        pl.BlockSpec((HIDDEN, HIDDEN), lambda i: (0, 0)),  # w2
        pl.BlockSpec((1, HIDDEN), lambda i: (0, 0)),       # b2
        pl.BlockSpec((HIDDEN, D), lambda i: (0, 0)),       # w3
        pl.BlockSpec((1, D), lambda i: (0, 0)),            # b3
    ]
    out_spec = pl.BlockSpec((block_b, D), lambda i: (i, 0))
    return in_specs, out_spec


def prepare_odefunc_params(params, matmul_dtype=jnp.float32):
    """Cast params ONCE outside the solver loop: weights -> matmul_dtype, biases -> f32."""
    w1, b1, w2, b2, w3, b3 = params
    return (w1.astype(matmul_dtype), b1.astype(jnp.float32),
            w2.astype(matmul_dtype), b2.astype(jnp.float32),
            w3.astype(matmul_dtype), b3.astype(jnp.float32))


def _vmem_estimate(block_b, D, y_dtype, matmul_dtype):
    itemsize = jnp.dtype(matmul_dtype).itemsize
    w_bytes = 2 * (D * HIDDEN + HIDDEN * HIDDEN + HIDDEN * D) * itemsize  # conservatively x2
    b_bytes = 2 * (2 * HIDDEN + D) * 4
    io_bytes = 2 * 2 * block_b * D * jnp.dtype(y_dtype).itemsize          # double-buffered y/out
    return w_bytes + b_bytes + io_bytes


@functools.partial(jax.jit, static_argnames=("matmul_dtype", "block_b"))
def odefunc_forward(t, y, params, *, matmul_dtype=jnp.float32, block_b=None):
    """Pallas equivalent of ODEFunc.forward(t, y) = net(y).  `t` is unused (as in PyTorch).

    Pass params through prepare_odefunc_params(params, matmul_dtype) once, outside the
    solver loop; the .astype calls below are then no-ops.  bf16 matmul_dtype is
    recommended on all TPU generations (f32 accumulation / f32 tanh are kept).
    """
    del t  # ODEFunc ignores t
    w1, b1, w2, b2, w3, b3 = params
    B, D = y.shape

    if block_b is None:
        block_b = _choose_block_b(B)
    B_pad = _round_up(B, block_b)
    grid = (B_pad // block_b,)

    y_in = y if B_pad == B else jnp.pad(y, ((0, B_pad - B), (0, 0)))

    # No-op converts when params were prepared with prepare_odefunc_params().
    w1 = w1.astype(matmul_dtype); w2 = w2.astype(matmul_dtype); w3 = w3.astype(matmul_dtype)
    b1 = b1.astype(jnp.float32); b2 = b2.astype(jnp.float32); b3 = b3.astype(jnp.float32)

    in_specs, out_spec = _mlp_specs(block_b, D)
    out = pl.pallas_call(
        _odefunc_kernel,
        out_shape=jax.ShapeDtypeStruct((B_pad, D), y.dtype),
        grid=grid,
        in_specs=in_specs,
        out_specs=out_spec,
        compiler_params=pltpu.CompilerParams(
            dimension_semantics=("parallel",),  # batch grid shardable across v7x TCs
            vmem_limit_bytes=_vmem_limit_bytes(_vmem_estimate(block_b, D, y.dtype, matmul_dtype)),
        ),
    )(y_in, w1, b1, w2, b2, w3, b3)

    return out if B_pad == B else out[:B]


@functools.partial(jax.jit, static_argnames=("n_steps", "dt", "matmul_dtype", "block_b"))
def odefunc_euler_integrate(y0, params, *, n_steps, dt,
                            matmul_dtype=jnp.float32, block_b=None):
    """Fused fixed-step Euler integration of dy/dt = net(y): one pallas_call, n_steps
    RHS evaluations, weights staged to VMEM once per batch tile."""
    w1, b1, w2, b2, w3, b3 = params
    B, D = y0.shape

    if block_b is None:
        block_b = _choose_block_b(B)
    B_pad = _round_up(B, block_b)
    grid = (B_pad // block_b,)

    y_in = y0 if B_pad == B else jnp.pad(y0, ((0, B_pad - B), (0, 0)))

    w1 = w1.astype(matmul_dtype); w2 = w2.astype(matmul_dtype); w3 = w3.astype(matmul_dtype)
    b1 = b1.astype(jnp.float32); b2 = b2.astype(jnp.float32); b3 = b3.astype(jnp.float32)

    kernel = functools.partial(_odefunc_euler_kernel, n_steps=int(n_steps), dt=float(dt))
    in_specs, out_spec = _mlp_specs(block_b, D)
    out = pl.pallas_call(
        kernel,
        out_shape=jax.ShapeDtypeStruct((B_pad, D), y0.dtype),
        grid=grid,
        in_specs=in_specs,
        out_specs=out_spec,
        compiler_params=pltpu.CompilerParams(
            dimension_semantics=("parallel",),
            vmem_limit_bytes=_vmem_limit_bytes(_vmem_estimate(block_b, D, y0.dtype, matmul_dtype)),
        ),
    )(y_in, w1, b1, w2, b2, w3, b3)

    return out if B_pad == B else out[:B]


def init_odefunc_params(key, input_dim, dtype=jnp.float32):
    """Deterministic init mimicking torch.nn.Linear default (uniform +/- 1/sqrt(fan_in)).

    Weights are stored pre-transposed as (in_features, out_features)."""
    ks = jax.random.split(key, 6)

    def linear(kw, kb, fan_in, fan_out):
        bound = 1.0 / jnp.sqrt(fan_in)
        w = jax.random.uniform(kw, (fan_in, fan_out), dtype, -bound, bound)
        b = jax.random.uniform(kb, (1, fan_out), dtype, -bound, bound)
        return w, b

    w1, b1 = linear(ks[0], ks[1], input_dim, HIDDEN)
    w2, b2 = linear(ks[2], ks[3], HIDDEN, HIDDEN)
    w3, b3 = linear(ks[4], ks[5], HIDDEN, input_dim)
    return (w1, b1, w2, b2, w3, b3)


def odefunc_reference(t, y, params):
    """Pure-JAX reference for correctness checking."""
    del t
    w1, b1, w2, b2, w3, b3 = params
    h = jnp.tanh(y @ w1 + b1)
    h = jnp.tanh(h @ w2 + b2)
    return h @ w3 + b3


if __name__ == "__main__":
    key = jax.random.PRNGKey(0)
    k_param, k_y = jax.random.split(key)

    batch = 16
    input_dim = 32  # small state dimension for the ODE

    params = init_odefunc_params(k_param, input_dim)
    y = jax.random.normal(k_y, (batch, input_dim), jnp.float32)
    t = jnp.float32(0.0)  # unused, kept for signature parity with ODEFunc.forward

    ref = odefunc_reference(t, y, params)

    # f32 matmul path.
    params_f32 = prepare_odefunc_params(params, jnp.float32)
    out_f32 = jax.block_until_ready(odefunc_forward(t, y, params_f32, matmul_dtype=jnp.float32))
    assert out_f32.shape == (batch, input_dim)
    assert jnp.allclose(out_f32, ref, atol=1e-5, rtol=1e-5), "Pallas f32 kernel mismatch vs reference"

    # bf16-operand matmul path (recommended on v5e/v6e/v7x; f32 accumulation, f32 tanh).
    params_bf16 = prepare_odefunc_params(params, jnp.bfloat16)
    out_bf16 = jax.block_until_ready(odefunc_forward(t, y, params_bf16, matmul_dtype=jnp.bfloat16))
    assert out_bf16.shape == (batch, input_dim)
    assert jnp.allclose(out_bf16, ref, atol=5e-2, rtol=5e-2), "Pallas bf16 kernel mismatch vs reference"

    # Fused multi-step Euler (weights resident in VMEM across all RHS evaluations).
    n_steps, dt = 8, 0.05
    euler_ref = y
    for _ in range(n_steps):
        euler_ref = euler_ref + dt * odefunc_reference(t, euler_ref, params)
    out_euler = jax.block_until_ready(
        odefunc_euler_integrate(y, params_f32, n_steps=n_steps, dt=dt, matmul_dtype=jnp.float32))
    assert out_euler.shape == (batch, input_dim)
    assert jnp.allclose(out_euler, euler_ref, atol=1e-4, rtol=1e-4), "Pallas Euler kernel mismatch vs reference"

    print("KERNEL_OK")
</pallas_src>

<mosaic_0001>
module attributes {stable_mosaic.version = 11 : i64} {
  func.func @_odefunc_kernel(%arg0: i32, %arg1: memref<16x32xf32, #tpu.memory_space<vmem>>, %arg2: memref<32x128xf32, #tpu.memory_space<vmem>>, %arg3: memref<1x128xf32, #tpu.memory_space<vmem>>, %arg4: memref<128x128xf32, #tpu.memory_space<vmem>>, %arg5: memref<1x128xf32, #tpu.memory_space<vmem>>, %arg6: memref<128x32xf32, #tpu.memory_space<vmem>>, %arg7: memref<1x32xf32, #tpu.memory_space<vmem>>, %arg8: memref<16x32xf32, #tpu.memory_space<vmem>>) attributes {dimension_semantics = [#tpu.dimension_semantics<parallel>], iteration_bounds = array<i64: 1>, scalar_prefetch = 0 : i64, scratch_operands = 0 : i64, tpu.core_type = #tpu.core_type<tc>, window_params = [{transform_indices = @transform_0, window_bounds = array<i64: 16, 32>}, {pipeline_mode = #tpu.pipeline_mode<synchronous>, transform_indices = @transform_1, window_bounds = array<i64: 32, 128>}, {pipeline_mode = #tpu.pipeline_mode<synchronous>, transform_indices = @transform_2, window_bounds = array<i64: 1, 128>}, {pipeline_mode = #tpu.pipeline_mode<synchronous>, transform_indices = @transform_3, window_bounds = array<i64: 128, 128>}, {pipeline_mode = #tpu.pipeline_mode<synchronous>, transform_indices = @transform_4, window_bounds = array<i64: 1, 128>}, {pipeline_mode = #tpu.pipeline_mode<synchronous>, transform_indices = @transform_5, window_bounds = array<i64: 128, 32>}, {pipeline_mode = #tpu.pipeline_mode<synchronous>, transform_indices = @transform_6, window_bounds = array<i64: 1, 32>}, {transform_indices = @transform_7, window_bounds = array<i64: 16, 32>}]} {
    %c0 = arith.constant 0 : index
    %c0_0 = arith.constant 0 : index
    %0 = vector.load %arg1[%c0, %c0_0] : memref<16x32xf32, #tpu.memory_space<vmem>>, vector<16x32xf32>
    %c0_1 = arith.constant 0 : index
    %c0_2 = arith.constant 0 : index
    %1 = vector.load %arg2[%c0_1, %c0_2] : memref<32x128xf32, #tpu.memory_space<vmem>>, vector<32x128xf32>
    %c0_3 = arith.constant 0 : index
    %c0_4 = arith.constant 0 : index
    %2 = vector.load %arg3[%c0_3, %c0_4] : memref<1x128xf32, #tpu.memory_space<vmem>>, vector<1x128xf32>
    %c0_5 = arith.constant 0 : index
    %c0_6 = arith.constant 0 : index
    %3 = vector.load %arg4[%c0_5, %c0_6] : memref<128x128xf32, #tpu.memory_space<vmem>>, vector<128x128xf32>
    %c0_7 = arith.constant 0 : index
    %c0_8 = arith.constant 0 : index
    %4 = vector.load %arg5[%c0_7, %c0_8] : memref<1x128xf32, #tpu.memory_space<vmem>>, vector<1x128xf32>
    %c0_9 = arith.constant 0 : index
    %c0_10 = arith.constant 0 : index
    %5 = vector.load %arg6[%c0_9, %c0_10] : memref<128x32xf32, #tpu.memory_space<vmem>>, vector<128x32xf32>
    %c0_11 = arith.constant 0 : index
    %c0_12 = arith.constant 0 : index
    %6 = vector.load %arg7[%c0_11, %c0_12] : memref<1x32xf32, #tpu.memory_space<vmem>>, vector<1x32xf32>
    %cst = arith.constant dense<0.000000e+00> : vector<16x128xf32>
    %7 = tpu.matmul %0, %1, %cst {dimension_numbers = #tpu.dot_dimension_numbers<[1], [0], [0], [1], [0, 0, 1, 1], [], []>} : vector<16x32xf32>, vector<32x128xf32>, vector<16x128xf32> -> vector<16x128xf32>
    %8 = vector.broadcast %2 : vector<1x128xf32> to vector<16x128xf32>
    %9 = arith.addf %7, %8 : vector<16x128xf32>
    %10 = math.tanh %9 : vector<16x128xf32>
    %cst_13 = arith.constant dense<0.000000e+00> : vector<16x128xf32>
    %11 = tpu.matmul %10, %3, %cst_13 {dimension_numbers = #tpu.dot_dimension_numbers<[1], [0], [0], [1], [0, 0, 1, 1], [], []>} : vector<16x128xf32>, vector<128x128xf32>, vector<16x128xf32> -> vector<16x128xf32>
    %12 = vector.broadcast %4 : vector<1x128xf32> to vector<16x128xf32>
    %13 = arith.addf %11, %12 : vector<16x128xf32>
    %14 = math.tanh %13 : vector<16x128xf32>
    %cst_14 = arith.constant dense<0.000000e+00> : vector<16x32xf32>
    %15 = tpu.matmul %14, %5, %cst_14 {dimension_numbers = #tpu.dot_dimension_numbers<[1], [0], [0], [1], [0, 0, 1, 1], [], []>} : vector<16x128xf32>, vector<128x32xf32>, vector<16x32xf32> -> vector<16x32xf32>
    %16 = vector.broadcast %6 : vector<1x32xf32> to vector<16x32xf32>
    %17 = arith.addf %15, %16 : vector<16x32xf32>
    %c0_15 = arith.constant 0 : index
    %c0_16 = arith.constant 0 : index
    %18 = vector.load %arg8[%c0_15, %c0_16] : memref<16x32xf32, #tpu.memory_space<vmem>>, vector<16x32xf32>
    tpu.vector_store %arg8[%c0_15, %c0_16], %17 {strides = array<i32>} : memref<16x32xf32, #tpu.memory_space<vmem>>, vector<16x32xf32>,
    return
  }
  func.func @transform_0(%arg0: i32) -> (i32, i32) {
    %c0_i32 = arith.constant 0 : i32
    %c0_i32_0 = arith.constant 0 : i32
    return %arg0, %c0_i32 : i32, i32
  }
  func.func @transform_1(%arg0: i32) -> (i32, i32) {
    %c0_i32 = arith.constant 0 : i32
    %c0_i32_0 = arith.constant 0 : i32
    %c0_i32_1 = arith.constant 0 : i32
    return %c0_i32, %c0_i32_0 : i32, i32
  }
  func.func @transform_2(%arg0: i32) -> (i32, i32) {
    %c0_i32 = arith.constant 0 : i32
    %c0_i32_0 = arith.constant 0 : i32
    %c0_i32_1 = arith.constant 0 : i32
    return %c0_i32, %c0_i32_0 : i32, i32
  }
  func.func @transform_3(%arg0: i32) -> (i32, i32) {
    %c0_i32 = arith.constant 0 : i32
    %c0_i32_0 = arith.constant 0 : i32
    %c0_i32_1 = arith.constant 0 : i32
    return %c0_i32, %c0_i32_0 : i32, i32
  }
  func.func @transform_4(%arg0: i32) -> (i32, i32) {
    %c0_i32 = arith.constant 0 : i32
    %c0_i32_0 = arith.constant 0 : i32
    %c0_i32_1 = arith.constant 0 : i32
    return %c0_i32, %c0_i32_0 : i32, i32
  }
  func.func @transform_5(%arg0: i32) -> (i32, i32) {
    %c0_i32 = arith.constant 0 : i32
    %c0_i32_0 = arith.constant 0 : i32
    %c0_i32_1 = arith.constant 0 : i32
    return %c0_i32, %c0_i32_0 : i32, i32
  }
  func.func @transform_6(%arg0: i32) -> (i32, i32) {
    %c0_i32 = arith.constant 0 : i32
    %c0_i32_0 = arith.constant 0 : i32
    %c0_i32_1 = arith.constant 0 : i32
    return %c0_i32, %c0_i32_0 : i32, i32
  }
  func.func @transform_7(%arg0: i32) -> (i32, i32) {
    %c0_i32 = arith.constant 0 : i32
    %c0_i32_0 = arith.constant 0 : i32
    return %arg0, %c0_i32 : i32, i32
  }
}

</mosaic_0001>

<llo_original>
// kernel: odefunc_forward.1
$region0: #{odefunc_forward.1}
  #allocation0 [shape = 'u32[]', space=smem, size = 0x4, offset = 0x4, fixed_abs, tag = 'smem constant byte address 0x4 - core index']
  #allocation1 [shape = 'u32[144,128]{1,0:T(1,128)}', space=vmem, size = 0x12000, scoped, tag = 'internal scratch']
  %s0 = inlined_call_operand.hbm [shape: f32[16,32], index: 0, kind: input, shape index: {}]
  %s1 = inlined_call_operand.vmem [shape: f32[32,128], index: 1, kind: input, shape index: {}]
  %s2 = inlined_call_operand.vmem [shape: f32[1,128], index: 2, kind: input, shape index: {}]
  %s3 = inlined_call_operand.vmem [shape: f32[128,128], index: 3, kind: input, shape index: {}]
  %s4 = inlined_call_operand.vmem [shape: f32[1,128], index: 4, kind: input, shape index: {}]
  %s5 = inlined_call_operand.vmem [shape: f32[128,32], index: 5, kind: input, shape index: {}]
  %s6 = inlined_call_operand.vmem [shape: f32[1,32], index: 6, kind: input, shape index: {}]
  %s7 = inlined_call_operand.hbm [shape: f32[16,32], index: 7, kind: output, shape index: {}]
  %s8 = sld [smem:[#allocation0]]
  $region42: #{odefunc_forward.1} parent=0
    _
  %s10 = ssub.s32 1, %s8
  %s11 = scalar_select 0, %s10, %s8
  $region1: #{odefunc_forward.1} parent=0
    #allocation2 [shape = 'u8[8192]{0}', space=vmem, size = 0x2000, scoped, tag = 'input window, operand 0, single buffered']
    #allocation3 [shape = 's32[1]{0}', space=sflag, size = 0x4, scoped, tag = 'scoped memory for odefunc_forward.1']
    #allocation4 [shape = 's32[1]{0}', space=sflag, size = 0x4, scoped, tag = 'scoped memory for odefunc_forward.1']
    #allocation5 [shape = 'u8[8192]{0}', space=vmem, size = 0x2000, scoped, tag = 'output window, operand 0, single buffered']
    %12 = vsyncpa [#allocation3], 0
    %13 = vsyncpa [#allocation4], 0
    // Predicated region
    $region2: #{odefunc_forward.1} parent=1 // pred_check
      _
    $region3: #{odefunc_forward.1} parent=1 // pred_check_branch
      %15 = sbr.rel (0) target = $region5
    $region4: #{odefunc_forward.1} parent=1 // pred_region
      %s17 = ssub.s32 256, 256
      %18 = vsyncadd [#allocation3], %s17
      %s19 = sshll.u32 [#allocation2], 4
      %s20 = int_to_ptr.vmem [resolvable:$true] %s19
      %25 = dma.hbm_to_vmem [thread:$0]  %s0, 256, %s20, [#allocation3], 128, 128, 8
    $region5: #{odefunc_forward.1} parent=1 // pred_fallthru
      _
    // Predicated region
    $region6: #{odefunc_forward.1} parent=1 // pred_check
      _
    $region7: #{odefunc_forward.1} parent=1 // pred_check_branch
      %27 = sbr.rel (0) target = $region9
    $region8: #{odefunc_forward.1} parent=1 // pred_region
      _
    $region9: #{odefunc_forward.1} parent=1 // pred_fallthru
      _
    // Predicated region
    $region10: #{odefunc_forward.1} parent=1 // pred_check
      _
    $region11: #{odefunc_forward.1} parent=1 // pred_check_branch
      %29 = sbr.rel (0) target = $region13
    $region12: #{odefunc_forward.1} parent=1 // pred_region
      _
    $region13: #{odefunc_forward.1} parent=1 // pred_fallthru
      _
    // Predicated region
    $region14: #{odefunc_forward.1} parent=1 // pred_check
      _
    $region15: #{odefunc_forward.1} parent=1 // pred_check_branch
      %31 = sbr.rel (0) target = $region17
    $region16: #{odefunc_forward.1} parent=1 // pred_region
      _
    $region17: #{odefunc_forward.1} parent=1 // pred_fallthru
      _
    // Predicated region
    $region18: #{odefunc_forward.1} parent=1 // pred_check
      _
    $region19: #{odefunc_forward.1} parent=1 // pred_check_branch
      %33 = sbr.rel (0) target = $region21
    $region20: #{odefunc_forward.1} parent=1 // pred_region
      _
    $region21: #{odefunc_forward.1} parent=1 // pred_fallthru
      _
    // Predicated region
    $region22: #{odefunc_forward.1} parent=1 // pred_check
      _
    $region23: #{odefunc_forward.1} parent=1 // pred_check_branch
      %35 = sbr.rel (0) target = $region25
    $region24: #{odefunc_forward.1} parent=1 // pred_region
      _
    $region25: #{odefunc_forward.1} parent=1 // pred_fallthru
      _
    // Predicated region
    $region26: #{odefunc_forward.1} parent=1 // pred_check
      _
    $region27: #{odefunc_forward.1} parent=1 // pred_check_branch
      %37 = sbr.rel (0) target = $region29
    $region28: #{odefunc_forward.1} parent=1 // pred_region
      _
    $region29: #{odefunc_forward.1} parent=1 // pred_fallthru
      _
    // Predicated region
    $region30: #{odefunc_forward.1} parent=1 // pred_check
      _
    $region31: #{odefunc_forward.1} parent=1 // pred_check_branch
      %39 = sbr.rel (0) target = $region33
    $region32: #{odefunc_forward.1} parent=1 // pred_region
      %40 = dma.done [#allocation3], 256
    $region33: #{odefunc_forward.1} parent=1 // pred_fallthru
      _
    %v41 = vld [vmem:[#allocation2] sm:$0xff]
    %v42 = vld [vmem:[#allocation2 + $0x8] sm:$0xff]
    %v43 = vld [vmem:[%s1] sm:$0xff]
    %v44 = vld [vmem:[%s1 + $0x8] sm:$0xff]
    %v45 = vld [vmem:[%s1 + $0x10] sm:$0xff]
    %v46 = vld [vmem:[%s1 + $0x18] sm:$0xff]
    %v47 = vld [vmem:[%s2] sm:$0x1]
    %v48 = vld [vmem:[%s3] sm:$0xff]
    %v49 = vld [vmem:[%s3 + $0x8] sm:$0xff]
    %v50 = vld [vmem:[%s3 + $0x10] sm:$0xff]
    %v51 = vld [vmem:[%s3 + $0x18] sm:$0xff]
    %v52 = vld [vmem:[%s3 + $0x20] sm:$0xff]
    %v53 = vld [vmem:[%s3 + $0x28] sm:$0xff]
    %v54 = vld [vmem:[%s3 + $0x30] sm:$0xff]
    %v55 = vld [vmem:[%s3 + $0x38] sm:$0xff]
    %v56 = vld [vmem:[%s3 + $0x40] sm:$0xff]
    %v57 = vld [vmem:[%s3 + $0x48] sm:$0xff]
    %v58 = vld [vmem:[%s3 + $0x50] sm:$0xff]
    %v59 = vld [vmem:[%s3 + $0x58] sm:$0xff]
    %v60 = vld [vmem:[%s3 + $0x60] sm:$0xff]
    %v61 = vld [vmem:[%s3 + $0x68] sm:$0xff]
    %v62 = vld [vmem:[%s3 + $0x70] sm:$0xff]
    %v63 = vld [vmem:[%s3 + $0x78] sm:$0xff]
    %v64 = vld [vmem:[%s4] sm:$0x1]
    %v65 = vld [vmem:[%s5] sm:$0xff]
    %v66 = vld [vmem:[%s5 + $0x8] sm:$0xff]
    %v67 = vld [vmem:[%s5 + $0x10] sm:$0xff]
    %v68 = vld [vmem:[%s5 + $0x18] sm:$0xff]
    %v69 = vld [vmem:[%s5 + $0x20] sm:$0xff]
    %v70 = vld [vmem:[%s5 + $0x28] sm:$0xff]
    %v71 = vld [vmem:[%s5 + $0x30] sm:$0xff]
    %v72 = vld [vmem:[%s5 + $0x38] sm:$0xff]
    %v73 = vld [vmem:[%s5 + $0x40] sm:$0xff]
    %v74 = vld [vmem:[%s5 + $0x48] sm:$0xff]
    %v75 = vld [vmem:[%s5 + $0x50] sm:$0xff]
    %v76 = vld [vmem:[%s5 + $0x58] sm:$0xff]
    %v77 = vld [vmem:[%s5 + $0x60] sm:$0xff]
    %v78 = vld [vmem:[%s5 + $0x68] sm:$0xff]
    %v79 = vld [vmem:[%s5 + $0x70] sm:$0xff]
    %v80 = vld [vmem:[%s5 + $0x78] sm:$0xff]
    %v81 = vld [vmem:[%s6] sm:$0x1]
    %v83 = vlaneseq
    %v84 = vshrl.u32 %v83, 7
    %v85 = vsub.s32 0, %v84
    %v86 = vrot.slane %v47, %v85
    %vm88 = vcmask 261120
    %v90 = vsel %vm88, %v41, 0
    %v93 = vsel %vm88, %v42, 0
    %95 = vmatprep.subr.mxu0 0.0
    %96 = vmatpush1.msra.mxu0 0.0
    %97 = vmatprep.subr.mxu0 0.0
    %98 = vmatpush1.msra.mxu0 0.0
    %99 = vmatprep.subr.mxu0 0.0
    %100 = vmatpush1.msra.mxu0 0.0
    %101 = vmatprep.subr.mxu0 0.0
    %102 = vmatpush1.msra.mxu0 0.0
    %103 = vmatprep.subr.mxu0 0.0
    %104 = vmatpush1.msra.mxu0 0.0
    %105 = vmatprep.subr.mxu0 0.0
    %106 = vmatpush1.msra.mxu0 0.0
    %107 = vmatprep.subr.mxu0 0.0
    %108 = vmatpush1.msra.mxu0 0.0
    %109 = vmatprep.subr.mxu0 0.0
    %110 = vmatpush1.msra.mxu0 0.0
    %111 = vmatprep.subr.mxu0 0.0
    %112 = vmatpush1.msra.mxu0 0.0
    %113 = vmatprep.subr.mxu0 0.0
    %114 = vmatpush1.msra.mxu0 0.0
    %115 = vmatprep.subr.mxu0 0.0
    %116 = vmatpush1.msra.mxu0 0.0
    %117 = vmatprep.subr.mxu0 0.0
    %118 = vmatpush1.msra.mxu0 0.0
    %119 = vmatprep.subr.mxu0 0.0
    %120 = vmatpush1.msra.mxu0 %v46
    %121 = vmatprep.subr.mxu0 0.0
    %122 = vmatpush1.msra.mxu0 %v45
    %123 = vmatprep.subr.mxu0 0.0
    %124 = vmatpush1.msra.mxu0 %v44
    %125 = vmatprep.subr.mxu0 0.0
    %126 = vmatpush1.msra.mxu0 %v43
    %127 = vmatprep.subr.mxu0 0.0
    %128 = vmatpush2.msra.mxu0 0.0
    %129 = vmatprep.subr.mxu0 0.0
    %130 = vmatpush2.msra.mxu0 0.0
    %131 = vmatprep.subr.mxu0 0.0
    %132 = vmatpush2.msra.mxu0 0.0
    %133 = vmatprep.subr.mxu0 0.0
    %134 = vmatpush2.msra.mxu0 0.0
    %135 = vmatprep.subr.mxu0 0.0
    %136 = vmatpush2.msra.mxu0 0.0
    %137 = vmatprep.subr.mxu0 0.0
    %138 = vmatpush2.msra.mxu0 0.0
    %139 = vmatprep.subr.mxu0 0.0
    %140 = vmatpush2.msra.mxu0 0.0
    %141 = vmatprep.subr.mxu0 0.0
    %142 = vmatpush2.msra.mxu0 0.0
    %143 = vmatprep.subr.mxu0 0.0
    %144 = vmatpush2.msra.mxu0 0.0
    %145 = vmatprep.subr.mxu0 0.0
    %146 = vmatpush2.msra.mxu0 0.0
    %147 = vmatprep.subr.mxu0 0.0
    %148 = vmatpush2.msra.mxu0 0.0
    %149 = vmatprep.subr.mxu0 0.0
    %150 = vmatpush2.msra.mxu0 0.0
    %151 = vmatprep.subr.mxu0 0.0
    %152 = vmatpush2.msra.mxu0 0.0
    %153 = vmatprep.subr.mxu0 0.0
    %154 = vmatpush2.msra.mxu0 0.0
    %155 = vmatprep.subr.mxu0 0.0
    %156 = vmatpush2.msra.mxu0 0.0
    %157 = vmatprep.subr.mxu0 0.0
    %158 = vmatpush2.msra.mxu0 0.0
    %159 = vmatprep.mubr.f32.mxu0 0.0
    %160 = vmatmul.mubr.f32.gmra.mxu0 %v90
    %v161 = vpop.f32.mrf.mxu0
    %v162 = vadd.f32 %v86, %v161
    %v163 = vpop.f32.mrf.mxu0
    %164 = vmatprep.mubr.f32.mxu0 0.0
    %165 = vmatmul.mubr.f32.gmra.mxu0 %v93
    %v166 = vpop.f32.mrf.mxu0
    %v167 = vadd.f32 %v86, %v166
    %v168 = vpop.f32.mrf.mxu0
    %169 = vdwg.mxu0
    %v170 = vtanh.pop %v162
    %v171 = vtanh.pop %v167
    %v173 = vlaneseq
    %v174 = vshrl.u32 %v173, 7
    %v175 = vsub.s32 0, %v174
    %v176 = vrot.slane %v64, %v175
    %178 = vmatprep.subr.mxu0 0.0
    %179 = vmatpush1.msra.mxu0 %v63
    %180 = vmatprep.subr.mxu0 0.0
    %181 = vmatpush1.msra.mxu0 %v62
    %182 = vmatprep.subr.mxu0 0.0
    %183 = vmatpush1.msra.mxu0 %v61
    %184 = vmatprep.subr.mxu0 0.0
    %185 = vmatpush1.msra.mxu0 %v60
    %186 = vmatprep.subr.mxu0 0.0
    %187 = vmatpush1.msra.mxu0 %v59
    %188 = vmatprep.subr.mxu0 0.0
    %189 = vmatpush1.msra.mxu0 %v58
    %190 = vmatprep.subr.mxu0 0.0
    %191 = vmatpush1.msra.mxu0 %v57
    %192 = vmatprep.subr.mxu0 0.0
    %193 = vmatpush1.msra.mxu0 %v56
    %194 = vmatprep.subr.mxu0 0.0
    %195 = vmatpush1.msra.mxu0 %v55
    %196 = vmatprep.subr.mxu0 0.0
    %197 = vmatpush1.msra.mxu0 %v54
    %198 = vmatprep.subr.mxu0 0.0
    %199 = vmatpush1.msra.mxu0 %v53
    %200 = vmatprep.subr.mxu0 0.0
    %201 = vmatpush1.msra.mxu0 %v52
    %202 = vmatprep.subr.mxu0 0.0
    %203 = vmatpush1.msra.mxu0 %v51
    %204 = vmatprep.subr.mxu0 0.0
    %205 = vmatpush1.msra.mxu0 %v50
    %206 = vmatprep.subr.mxu0 0.0
    %207 = vmatpush1.msra.mxu0 %v49
    %208 = vmatprep.subr.mxu0 0.0
    %209 = vmatpush1.msra.mxu0 %v48
    %210 = vmatprep.subr.mxu0 0.0
    %211 = vmatpush2.msra.mxu0 0.0
    %212 = vmatprep.subr.mxu0 0.0
    %213 = vmatpush2.msra.mxu0 0.0
    %214 = vmatprep.subr.mxu0 0.0
    %215 = vmatpush2.msra.mxu0 0.0
    %216 = vmatprep.subr.mxu0 0.0
    %217 = vmatpush2.msra.mxu0 0.0
    %218 = vmatprep.subr.mxu0 0.0
    %219 = vmatpush2.msra.mxu0 0.0
    %220 = vmatprep.subr.mxu0 0.0
    %221 = vmatpush2.msra.mxu0 0.0
    %222 = vmatprep.subr.mxu0 0.0
    %223 = vmatpush2.msra.mxu0 0.0
    %224 = vmatprep.subr.mxu0 0.0
    %225 = vmatpush2.msra.mxu0 0.0
    %226 = vmatprep.subr.mxu0 0.0
    %227 = vmatpush2.msra.mxu0 0.0
    %228 = vmatprep.subr.mxu0 0.0
    %229 = vmatpush2.msra.mxu0 0.0
    %230 = vmatprep.subr.mxu0 0.0
    %231 = vmatpush2.msra.mxu0 0.0
    %232 = vmatprep.subr.mxu0 0.0
    %233 = vmatpush2.msra.mxu0 0.0
    %234 = vmatprep.subr.mxu0 0.0
    %235 = vmatpush2.msra.mxu0 0.0
    %236 = vmatprep.subr.mxu0 0.0
    %237 = vmatpush2.msra.mxu0 0.0
    %238 = vmatprep.subr.mxu0 0.0
    %239 = vmatpush2.msra.mxu0 0.0
    %240 = vmatprep.subr.mxu0 0.0
    %241 = vmatpush2.msra.mxu0 0.0
    %242 = vmatprep.mubr.f32.mxu0 0.0
    %243 = vmatmul.mubr.f32.gmra.mxu0 %v170
    %v244 = vpop.f32.mrf.mxu0
    %v245 = vadd.f32 %v176, %v244
    %v246 = vpop.f32.mrf.mxu0
    %247 = vmatprep.mubr.f32.mxu0 0.0
    %248 = vmatmul.mubr.f32.gmra.mxu0 %v171
    %v249 = vpop.f32.mrf.mxu0
    %v250 = vadd.f32 %v176, %v249
    %v251 = vpop.f32.mrf.mxu0
    %252 = vdwg.mxu0
    %v253 = vtanh.pop %v245
    %v254 = vtanh.pop %v250
    %v256 = vlaneseq
    %v257 = vshrl.u32 %v256, 7
    %v258 = vsub.s32 0, %v257
    %v259 = vrot.slane %v81, %v258
    %261 = vmatprep.subr.mxu0 0.0
    %262 = vmatpush1.msra.mxu0 %v80
    %263 = vmatprep.subr.mxu0 0.0
    %264 = vmatpush1.msra.mxu0 %v79
    %265 = vmatprep.subr.mxu0 0.0
    %266 = vmatpush1.msra.mxu0 %v78
    %267 = vmatprep.subr.mxu0 0.0
    %268 = vmatpush1.msra.mxu0 %v77
    %269 = vmatprep.subr.mxu0 0.0
    %270 = vmatpush1.msra.mxu0 %v76
    %271 = vmatprep.subr.mxu0 0.0
    %272 = vmatpush1.msra.mxu0 %v75
    %273 = vmatprep.subr.mxu0 0.0
    %274 = vmatpush1.msra.mxu0 %v74
    %275 = vmatprep.subr.mxu0 0.0
    %276 = vmatpush1.msra.mxu0 %v73
    %277 = vmatprep.subr.mxu0 0.0
    %278 = vmatpush1.msra.mxu0 %v72
    %279 = vmatprep.subr.mxu0 0.0
    %280 = vmatpush1.msra.mxu0 %v71
    %281 = vmatprep.subr.mxu0 0.0
    %282 = vmatpush1.msra.mxu0 %v70
    %283 = vmatprep.subr.mxu0 0.0
    %284 = vmatpush1.msra.mxu0 %v69
    %285 = vmatprep.subr.mxu0 0.0
    %286 = vmatpush1.msra.mxu0 %v68
    %287 = vmatprep.subr.mxu0 0.0
    %288 = vmatpush1.msra.mxu0 %v67
    %289 = vmatprep.subr.mxu0 0.0
    %290 = vmatpush1.msra.mxu0 %v66
    %291 = vmatprep.subr.mxu0 0.0
    %292 = vmatpush1.msra.mxu0 %v65
    %293 = vmatprep.subr.mxu0 0.0
    %294 = vmatpush2.msra.mxu0 0.0
    %295 = vmatprep.subr.mxu0 0.0
    %296 = vmatpush2.msra.mxu0 0.0
    %297 = vmatprep.subr.mxu0 0.0
    %298 = vmatpush2.msra.mxu0 0.0
    %299 = vmatprep.subr.mxu0 0.0
    %300 = vmatpush2.msra.mxu0 0.0
    %301 = vmatprep.subr.mxu0 0.0
    %302 = vmatpush2.msra.mxu0 0.0
    %303 = vmatprep.subr.mxu0 0.0
    %304 = vmatpush2.msra.mxu0 0.0
    %305 = vmatprep.subr.mxu0 0.0
    %306 = vmatpush2.msra.mxu0 0.0
    %307 = vmatprep.subr.mxu0 0.0
    %308 = vmatpush2.msra.mxu0 0.0
    %309 = vmatprep.subr.mxu0 0.0
    %310 = vmatpush2.msra.mxu0 0.0
    %311 = vmatprep.subr.mxu0 0.0
    %312 = vmatpush2.msra.mxu0 0.0
    %313 = vmatprep.subr.mxu0 0.0
    %314 = vmatpush2.msra.mxu0 0.0
    %315 = vmatprep.subr.mxu0 0.0
    %316 = vmatpush2.msra.mxu0 0.0
    %317 = vmatprep.subr.mxu0 0.0
    %318 = vmatpush2.msra.mxu0 0.0
    %319 = vmatprep.subr.mxu0 0.0
    %320 = vmatpush2.msra.mxu0 0.0
    %321 = vmatprep.subr.mxu0 0.0
    %322 = vmatpush2.msra.mxu0 0.0
    %323 = vmatprep.subr.mxu0 0.0
    %324 = vmatpush2.msra.mxu0 0.0
    %325 = vmatprep.mubr.f32.mxu0 0.0
    %326 = vmatmul.mubr.f32.gmra.mxu0 %v253
    %v327 = vpop.f32.mrf.mxu0
    %v328 = vadd.f32 %v259, %v327
    %v329 = vpop.f32.mrf.mxu0
    %330 = vmatprep.mubr.f32.mxu0 0.0
    %331 = vmatmul.mubr.f32.gmra.mxu0 %v254
    %v332 = vpop.f32.mrf.mxu0
    %v333 = vadd.f32 %v259, %v332
    %v334 = vpop.f32.mrf.mxu0
    %335 = vdwg.mxu0
    %336 = vst.msk [vmem:[#allocation5] sm:$0xff] %vm88, %v328
    %337 = vst.msk [vmem:[#allocation5 + $0x8] sm:$0xff] %vm88, %v333
    // Predicated region
    $region34: #{odefunc_forward.1} parent=1 // pred_check
      _
    $region35: #{odefunc_forward.1} parent=1 // pred_check_branch
      %339 = sbr.rel (0) target = $region37
    $region36: #{odefunc_forward.1} parent=1 // pred_region
      %s341 = ssub.s32 256, 256
      %342 = vsyncadd [#allocation4], %s341
      %s343 = sshll.u32 [#allocation5], 4
      %s344 = int_to_ptr.vmem [resolvable:$true] %s343
      %349 = dma.vmem_to_hbm [thread:$0]  %s344, 256, %s7, [#allocation4], 128, 128, 8
    $region37: #{odefunc_forward.1} parent=1 // pred_fallthru
      _
    // Predicated region
    $region38: #{odefunc_forward.1} parent=1 // pred_check
      _
    $region39: #{odefunc_forward.1} parent=1 // pred_check_branch
      %351 = sbr.rel (0) target = $region41
    $region40: #{odefunc_forward.1} parent=1 // pred_region
      %352 = dma.done [#allocation4], 256
    $region41: #{odefunc_forward.1} parent=1 // pred_fallthru
      _
    %353 = vsyncpa [#allocation3], 1
    %354 = vsyncpa [#allocation4], 1

</llo_original>
